<compile_context>
chip_gen: v6e
topology: v6e:2x2x1
jax: 0.10.0
libtpu: 0.0.40
codegen_flags: <defaults>
</compile_context>

<pallas_src>
import numpy as np
import jax
import jax.numpy as jnp
from jax import lax
from jax.experimental import pallas as pl
from jax.experimental.pallas import tpu as pltpu

_EPS = 1e-5
_H1, _H2, _H3 = 512, 128, 32
_LANE = 128


def _round_up(n, m):
    return ((n + m - 1) // m) * m


def _ffnn_kernel(x_ref,
                 w1_ref, gb1_ref,
                 w2_ref, gb2_ref,
                 w3_ref, gb3_ref,
                 wh_ref, bh_ref,
                 out_ref):
    inv_b = 1.0 / x_ref.shape[0]  # static batch size

    def lin_bn_relu(h, w_ref, gb_ref):
        # Linear (bias omitted -- cancelled exactly by BN mean subtraction).
        y = jnp.dot(h, w_ref[...], preferred_element_type=jnp.float32)
        # Single-pass biased batch statistics over the batch axis.
        s = jnp.sum(y, axis=0, keepdims=True)
        ss = jnp.sum(y * y, axis=0, keepdims=True)
        mean = s * inv_b
        var = jnp.maximum(ss * inv_b - mean * mean, 0.0)
        inv = lax.rsqrt(var + _EPS)          # EUP slot (effectively free)
        g = gb_ref[0:1, :]
        be = gb_ref[1:2, :]
        scale = g * inv                       # (1, F)
        shift = be - mean * scale             # (1, F)
        # Folded normalize + affine + ReLU: 2 VALU ops + max on (B, F).
        return jnp.maximum(y * scale + shift, 0.0)

    h = x_ref[...]
    h = lin_bn_relu(h, w1_ref, gb1_ref)
    h = lin_bn_relu(h, w2_ref, gb2_ref)
    h = lin_bn_relu(h, w3_ref, gb3_ref)
    # All output heads fused into one lane-padded matmul (unmasked store).
    out_ref[...] = (jnp.dot(h, wh_ref[...], preferred_element_type=jnp.float32)
                    + bh_ref[...])


def init_params(key, input_size, output_vector):
    """Deterministic synthetic parameters (shapes match the torch module)."""
    dims_in = [input_size, _H1, _H2]
    dims_out = [_H1, _H2, _H3]
    params = {}
    keys = jax.random.split(key, 8)
    for li, (din, dout) in enumerate(zip(dims_in, dims_out), start=1):
        kw, kb = jax.random.split(keys[li - 1])
        scale = 1.0 / np.sqrt(din)
        params[f"w{li}"] = jax.random.uniform(kw, (din, dout), jnp.float32,
                                              -scale, scale)
        params[f"b{li}"] = jax.random.uniform(kb, (1, dout), jnp.float32,
                                              -scale, scale)
        params[f"g{li}"] = jnp.ones((1, dout), jnp.float32)   # torch BN init
        params[f"be{li}"] = jnp.zeros((1, dout), jnp.float32)
    # Output heads Linear(32, n_i), concatenated along the output axis.
    total_out = int(sum(output_vector))
    kw, kb = jax.random.split(keys[7])
    scale = 1.0 / np.sqrt(_H3)
    params["wh"] = jax.random.uniform(kw, (_H3, total_out), jnp.float32,
                                      -scale, scale)
    params["bh"] = jax.random.uniform(kb, (1, total_out), jnp.float32,
                                      -scale, scale)
    return params


def prepare_kernel_params(params, input_size):
    """Pack / pad torch-shaped params into kernel-ready arrays (done once)."""
    # Pad the first matmul's K dim to a lane-width multiple (zero rows).
    din_p = _round_up(input_size, _LANE)
    w1 = params["w1"]
    if din_p != w1.shape[0]:
        w1 = jnp.pad(w1, ((0, din_p - w1.shape[0]), (0, 0)))
    # Pad the fused head to a lane-width multiple of output columns.
    total_out = params["wh"].shape[1]
    tot_p = _round_up(total_out, _LANE)
    wh = jnp.pad(params["wh"], ((0, 0), (0, tot_p - total_out)))
    bh = jnp.pad(params["bh"], ((0, 0), (0, tot_p - total_out)))
    kp = {
        "w1": w1,
        "w2": params["w2"],
        "w3": params["w3"],
        # gamma/beta packed into one (2, F) array per layer (fewer DMAs).
        "gb1": jnp.concatenate([params["g1"], params["be1"]], axis=0),
        "gb2": jnp.concatenate([params["g2"], params["be2"]], axis=0),
        "gb3": jnp.concatenate([params["g3"], params["be3"]], axis=0),
        "wh": wh,
        "bh": bh,
    }
    return kp


def multisoftmax_ffnn_forward(x, kernel_params, output_vector):
    """x: (B, input_size) f32.  Returns list of per-head logits."""
    B, din = x.shape
    din_p = kernel_params["w1"].shape[0]
    if din_p != din:
        x = jnp.pad(x, ((0, 0), (0, din_p - din)))
    tot_p = kernel_params["wh"].shape[1]

    args = (x,
            kernel_params["w1"], kernel_params["gb1"],
            kernel_params["w2"], kernel_params["gb2"],
            kernel_params["w3"], kernel_params["gb3"],
            kernel_params["wh"], kernel_params["bh"])
    vmem = pl.BlockSpec(memory_space=pltpu.MemorySpace.VMEM)
    out = pl.pallas_call(
        _ffnn_kernel,
        out_shape=jax.ShapeDtypeStruct((B, tot_p), jnp.float32),
        in_specs=[vmem] * len(args),
        out_specs=vmem,
    )(*args)

    # Slice the lane-padded output back into the per-head list.
    offs = np.cumsum([0] + list(output_vector))
    return [out[:, offs[i]:offs[i + 1]] for i in range(len(output_vector))]


def _reference_forward(x, params, output_vector):
    """Pure-JAX reference faithful to the torch module (keeps linear biases)."""
    def layer(h, w, b, g, be):
        y = h @ w + b
        mean = jnp.mean(y, axis=0, keepdims=True)
        var = jnp.mean((y - mean) ** 2, axis=0, keepdims=True)
        yn = (y - mean) / jnp.sqrt(var + _EPS)
        return jnp.maximum(yn * g + be, 0.0)

    h = layer(x, params["w1"], params["b1"], params["g1"], params["be1"])
    h = layer(h, params["w2"], params["b2"], params["g2"], params["be2"])
    h = layer(h, params["w3"], params["b3"], params["g3"], params["be3"])
    out = h @ params["wh"] + params["bh"]
    offs = np.cumsum([0] + list(output_vector))
    return [out[:, offs[i]:offs[i + 1]] for i in range(len(output_vector))]


if __name__ == "__main__":
    key = jax.random.PRNGKey(0)
    k_x, k_p = jax.random.split(key)

    batch = 8                    # NOTE: B=1 is degenerate for training-mode BN
    input_size = 64
    output_vector = [4, 3, 5]    # one softmax head per entry (logits returned)

    x = jax.random.normal(k_x, (batch, input_size), dtype=jnp.float32)
    params = init_params(k_p, input_size, output_vector)
    kparams = prepare_kernel_params(params, input_size)

    yhat = multisoftmax_ffnn_forward(x, kparams, output_vector)
    yhat = [jax.block_until_ready(y) for y in yhat]

    ref = _reference_forward(x, params, output_vector)
    for got, exp, n in zip(yhat, ref, output_vector):
        assert got.shape == (batch, n), got.shape
        np.testing.assert_allclose(np.asarray(got), np.asarray(exp),
                                   rtol=1e-4, atol=1e-4)

    print("KERNEL_OK")
</pallas_src>

<mosaic_0001>
module attributes {stable_mosaic.version = 11 : i64} {
  func.func @_ffnn_kernel(%arg0: memref<8x128xf32, #tpu.memory_space<vmem>>, %arg1: memref<128x512xf32, #tpu.memory_space<vmem>>, %arg2: memref<2x512xf32, #tpu.memory_space<vmem>>, %arg3: memref<512x128xf32, #tpu.memory_space<vmem>>, %arg4: memref<2x128xf32, #tpu.memory_space<vmem>>, %arg5: memref<128x32xf32, #tpu.memory_space<vmem>>, %arg6: memref<2x32xf32, #tpu.memory_space<vmem>>, %arg7: memref<32x128xf32, #tpu.memory_space<vmem>>, %arg8: memref<1x128xf32, #tpu.memory_space<vmem>>, %arg9: memref<8x128xf32, #tpu.memory_space<vmem>>) attributes {dimension_semantics = [], scalar_prefetch = 0 : i64, scratch_operands = 0 : i64, tpu.core_type = #tpu.core_type<tc>} {
    %c0 = arith.constant 0 : index
    %c0_0 = arith.constant 0 : index
    %0 = vector.load %arg0[%c0, %c0_0] : memref<8x128xf32, #tpu.memory_space<vmem>>, vector<8x128xf32>
    %c0_1 = arith.constant 0 : index
    %c0_2 = arith.constant 0 : index
    %1 = vector.load %arg1[%c0_1, %c0_2] : memref<128x512xf32, #tpu.memory_space<vmem>>, vector<128x512xf32>
    %cst = arith.constant dense<0.000000e+00> : vector<8x512xf32>
    %2 = tpu.matmul %0, %1, %cst {dimension_numbers = #tpu.dot_dimension_numbers<[1], [0], [0], [1], [0, 0, 1, 1], [], []>} : vector<8x128xf32>, vector<128x512xf32>, vector<8x512xf32> -> vector<8x512xf32>
    %cst_3 = arith.constant dense<0.000000e+00> : vector<512xf32>
    %3 = vector.multi_reduction <add>, %2, %cst_3 [0] : vector<8x512xf32> to vector<512xf32>
    %4 = vector.shape_cast %3 : vector<512xf32> to vector<1x512xf32>
    %5 = arith.mulf %2, %2 : vector<8x512xf32>
    %cst_4 = arith.constant dense<0.000000e+00> : vector<512xf32>
    %6 = vector.multi_reduction <add>, %5, %cst_4 [0] : vector<8x512xf32> to vector<512xf32>
    %7 = vector.shape_cast %6 : vector<512xf32> to vector<1x512xf32>
    %cst_5 = arith.constant 1.250000e-01 : f32
    %8 = vector.broadcast %cst_5 : f32 to vector<1x512xf32>
    %9 = arith.mulf %4, %8 : vector<1x512xf32>
    %cst_6 = arith.constant 1.250000e-01 : f32
    %10 = vector.broadcast %cst_6 : f32 to vector<1x512xf32>
    %11 = arith.mulf %7, %10 : vector<1x512xf32>
    %12 = arith.mulf %9, %9 : vector<1x512xf32>
    %13 = arith.subf %11, %12 : vector<1x512xf32>
    %cst_7 = arith.constant 0.000000e+00 : f32
    %14 = vector.broadcast %cst_7 : f32 to vector<1x512xf32>
    %15 = arith.maximumf %13, %14 : vector<1x512xf32>
    %cst_8 = arith.constant 9.99999974E-6 : f32
    %16 = vector.broadcast %cst_8 : f32 to vector<1x512xf32>
    %17 = arith.addf %15, %16 : vector<1x512xf32>
    %18 = math.rsqrt %17 : vector<1x512xf32>
    %c0_9 = arith.constant 0 : index
    %c0_10 = arith.constant 0 : index
    %19 = vector.load %arg2[%c0_9, %c0_10] : memref<2x512xf32, #tpu.memory_space<vmem>>, vector<1x512xf32>
    %c1 = arith.constant 1 : index
    %c0_11 = arith.constant 0 : index
    %20 = vector.load %arg2[%c1, %c0_11] : memref<2x512xf32, #tpu.memory_space<vmem>>, vector<1x512xf32>
    %21 = arith.mulf %19, %18 : vector<1x512xf32>
    %22 = arith.mulf %9, %21 : vector<1x512xf32>
    %23 = arith.subf %20, %22 : vector<1x512xf32>
    %24 = vector.broadcast %21 : vector<1x512xf32> to vector<8x512xf32>
    %25 = arith.mulf %2, %24 : vector<8x512xf32>
    %26 = vector.broadcast %23 : vector<1x512xf32> to vector<8x512xf32>
    %27 = arith.addf %25, %26 : vector<8x512xf32>
    %cst_12 = arith.constant 0.000000e+00 : f32
    %28 = vector.broadcast %cst_12 : f32 to vector<8x512xf32>
    %29 = arith.maximumf %27, %28 : vector<8x512xf32>
    %c0_13 = arith.constant 0 : index
    %c0_14 = arith.constant 0 : index
    %30 = vector.load %arg3[%c0_13, %c0_14] : memref<512x128xf32, #tpu.memory_space<vmem>>, vector<512x128xf32>
    %cst_15 = arith.constant dense<0.000000e+00> : vector<8x128xf32>
    %31 = tpu.matmul %29, %30, %cst_15 {dimension_numbers = #tpu.dot_dimension_numbers<[1], [0], [0], [1], [0, 0, 1, 1], [], []>} : vector<8x512xf32>, vector<512x128xf32>, vector<8x128xf32> -> vector<8x128xf32>
    %cst_16 = arith.constant dense<0.000000e+00> : vector<128xf32>
    %32 = vector.multi_reduction <add>, %31, %cst_16 [0] : vector<8x128xf32> to vector<128xf32>
    %33 = vector.shape_cast %32 : vector<128xf32> to vector<1x128xf32>
    %34 = arith.mulf %31, %31 : vector<8x128xf32>
    %cst_17 = arith.constant dense<0.000000e+00> : vector<128xf32>
    %35 = vector.multi_reduction <add>, %34, %cst_17 [0] : vector<8x128xf32> to vector<128xf32>
    %36 = vector.shape_cast %35 : vector<128xf32> to vector<1x128xf32>
    %cst_18 = arith.constant 1.250000e-01 : f32
    %37 = vector.broadcast %cst_18 : f32 to vector<1x128xf32>
    %38 = arith.mulf %33, %37 : vector<1x128xf32>
    %cst_19 = arith.constant 1.250000e-01 : f32
    %39 = vector.broadcast %cst_19 : f32 to vector<1x128xf32>
    %40 = arith.mulf %36, %39 : vector<1x128xf32>
    %41 = arith.mulf %38, %38 : vector<1x128xf32>
    %42 = arith.subf %40, %41 : vector<1x128xf32>
    %cst_20 = arith.constant 0.000000e+00 : f32
    %43 = vector.broadcast %cst_20 : f32 to vector<1x128xf32>
    %44 = arith.maximumf %42, %43 : vector<1x128xf32>
    %cst_21 = arith.constant 9.99999974E-6 : f32
    %45 = vector.broadcast %cst_21 : f32 to vector<1x128xf32>
    %46 = arith.addf %44, %45 : vector<1x128xf32>
    %47 = math.rsqrt %46 : vector<1x128xf32>
    %c0_22 = arith.constant 0 : index
    %c0_23 = arith.constant 0 : index
    %48 = vector.load %arg4[%c0_22, %c0_23] : memref<2x128xf32, #tpu.memory_space<vmem>>, vector<1x128xf32>
    %c1_24 = arith.constant 1 : index
    %c0_25 = arith.constant 0 : index
    %49 = vector.load %arg4[%c1_24, %c0_25] : memref<2x128xf32, #tpu.memory_space<vmem>>, vector<1x128xf32>
    %50 = arith.mulf %48, %47 : vector<1x128xf32>
    %51 = arith.mulf %38, %50 : vector<1x128xf32>
    %52 = arith.subf %49, %51 : vector<1x128xf32>
    %53 = vector.broadcast %50 : vector<1x128xf32> to vector<8x128xf32>
    %54 = arith.mulf %31, %53 : vector<8x128xf32>
    %55 = vector.broadcast %52 : vector<1x128xf32> to vector<8x128xf32>
    %56 = arith.addf %54, %55 : vector<8x128xf32>
    %cst_26 = arith.constant 0.000000e+00 : f32
    %57 = vector.broadcast %cst_26 : f32 to vector<8x128xf32>
    %58 = arith.maximumf %56, %57 : vector<8x128xf32>
    %c0_27 = arith.constant 0 : index
    %c0_28 = arith.constant 0 : index
    %59 = vector.load %arg5[%c0_27, %c0_28] : memref<128x32xf32, #tpu.memory_space<vmem>>, vector<128x32xf32>
    %cst_29 = arith.constant dense<0.000000e+00> : vector<8x32xf32>
    %60 = tpu.matmul %58, %59, %cst_29 {dimension_numbers = #tpu.dot_dimension_numbers<[1], [0], [0], [1], [0, 0, 1, 1], [], []>} : vector<8x128xf32>, vector<128x32xf32>, vector<8x32xf32> -> vector<8x32xf32>
    %cst_30 = arith.constant dense<0.000000e+00> : vector<32xf32>
    %61 = vector.multi_reduction <add>, %60, %cst_30 [0] : vector<8x32xf32> to vector<32xf32>
    %62 = vector.shape_cast %61 : vector<32xf32> to vector<1x32xf32>
    %63 = arith.mulf %60, %60 : vector<8x32xf32>
    %cst_31 = arith.constant dense<0.000000e+00> : vector<32xf32>
    %64 = vector.multi_reduction <add>, %63, %cst_31 [0] : vector<8x32xf32> to vector<32xf32>
    %65 = vector.shape_cast %64 : vector<32xf32> to vector<1x32xf32>
    %cst_32 = arith.constant 1.250000e-01 : f32
    %66 = vector.broadcast %cst_32 : f32 to vector<1x32xf32>
    %67 = arith.mulf %62, %66 : vector<1x32xf32>
    %cst_33 = arith.constant 1.250000e-01 : f32
    %68 = vector.broadcast %cst_33 : f32 to vector<1x32xf32>
    %69 = arith.mulf %65, %68 : vector<1x32xf32>
    %70 = arith.mulf %67, %67 : vector<1x32xf32>
    %71 = arith.subf %69, %70 : vector<1x32xf32>
    %cst_34 = arith.constant 0.000000e+00 : f32
    %72 = vector.broadcast %cst_34 : f32 to vector<1x32xf32>
    %73 = arith.maximumf %71, %72 : vector<1x32xf32>
    %cst_35 = arith.constant 9.99999974E-6 : f32
    %74 = vector.broadcast %cst_35 : f32 to vector<1x32xf32>
    %75 = arith.addf %73, %74 : vector<1x32xf32>
    %76 = math.rsqrt %75 : vector<1x32xf32>
    %c0_36 = arith.constant 0 : index
    %c0_37 = arith.constant 0 : index
    %77 = vector.load %arg6[%c0_36, %c0_37] : memref<2x32xf32, #tpu.memory_space<vmem>>, vector<1x32xf32>
    %c1_38 = arith.constant 1 : index
    %c0_39 = arith.constant 0 : index
    %78 = vector.load %arg6[%c1_38, %c0_39] : memref<2x32xf32, #tpu.memory_space<vmem>>, vector<1x32xf32>
    %79 = arith.mulf %77, %76 : vector<1x32xf32>
    %80 = arith.mulf %67, %79 : vector<1x32xf32>
    %81 = arith.subf %78, %80 : vector<1x32xf32>
    %82 = vector.broadcast %79 : vector<1x32xf32> to vector<8x32xf32>
    %83 = arith.mulf %60, %82 : vector<8x32xf32>
    %84 = vector.broadcast %81 : vector<1x32xf32> to vector<8x32xf32>
    %85 = arith.addf %83, %84 : vector<8x32xf32>
    %cst_40 = arith.constant 0.000000e+00 : f32
    %86 = vector.broadcast %cst_40 : f32 to vector<8x32xf32>
    %87 = arith.maximumf %85, %86 : vector<8x32xf32>
    %c0_41 = arith.constant 0 : index
    %c0_42 = arith.constant 0 : index
    %88 = vector.load %arg7[%c0_41, %c0_42] : memref<32x128xf32, #tpu.memory_space<vmem>>, vector<32x128xf32>
    %cst_43 = arith.constant dense<0.000000e+00> : vector<8x128xf32>
    %89 = tpu.matmul %87, %88, %cst_43 {dimension_numbers = #tpu.dot_dimension_numbers<[1], [0], [0], [1], [0, 0, 1, 1], [], []>} : vector<8x32xf32>, vector<32x128xf32>, vector<8x128xf32> -> vector<8x128xf32>
    %c0_44 = arith.constant 0 : index
    %c0_45 = arith.constant 0 : index
    %90 = vector.load %arg8[%c0_44, %c0_45] : memref<1x128xf32, #tpu.memory_space<vmem>>, vector<1x128xf32>
    %91 = vector.broadcast %90 : vector<1x128xf32> to vector<8x128xf32>
    %92 = arith.addf %89, %91 : vector<8x128xf32>
    %c0_46 = arith.constant 0 : index
    %c0_47 = arith.constant 0 : index
    %93 = vector.load %arg9[%c0_46, %c0_47] : memref<8x128xf32, #tpu.memory_space<vmem>>, vector<8x128xf32>
    tpu.vector_store %arg9[%c0_46, %c0_47], %92 {strides = array<i32>} : memref<8x128xf32, #tpu.memory_space<vmem>>, vector<8x128xf32>,
    return
  }
}

</mosaic_0001>

<llo_original>
// kernel: tpu_custom_call.1
$region0: #{tpu_custom_call.1}
  #allocation0 [shape = 'u32[]', space=smem, size = 0x4, offset = 0x4, fixed_abs, tag = 'smem constant byte address 0x4 - core index']
  #allocation1 [shape = 'u32[144,128]{1,0:T(1,128)}', space=vmem, size = 0x12000, scoped, tag = 'internal scratch']
  %s0 = inlined_call_operand.vmem [shape: f32[8,128], index: 0, kind: input, shape index: {}]
  %s1 = inlined_call_operand.hbm [shape: f32[128,512], index: 1, kind: input, shape index: {}]
  %s2 = inlined_call_operand.vmem [shape: f32[2,512], index: 2, kind: input, shape index: {}]
  %s3 = inlined_call_operand.hbm [shape: f32[512,128], index: 3, kind: input, shape index: {}]
  %s4 = inlined_call_operand.vmem [shape: f32[2,128], index: 4, kind: input, shape index: {}]
  %s5 = inlined_call_operand.vmem [shape: f32[128,32], index: 5, kind: input, shape index: {}]
  %s6 = inlined_call_operand.vmem [shape: f32[2,32], index: 6, kind: input, shape index: {}]
  %s7 = inlined_call_operand.vmem [shape: f32[32,128], index: 7, kind: input, shape index: {}]
  %s8 = inlined_call_operand.vmem [shape: f32[1,128], index: 8, kind: input, shape index: {}]
  %s9 = inlined_call_operand.hbm [shape: f32[8,128], index: 9, kind: output, shape index: {}]
  %s10 = sld [smem:[#allocation0]]
  $region54: #{tpu_custom_call.1} parent=0
    _
  %s12 = ssub.s32 1, %s10
  %s13 = scalar_select 0, %s12, %s10
  $region1: #{tpu_custom_call.1} parent=0
    #allocation2 [shape = 'u8[262144]{0}', space=vmem, size = 0x40000, scoped, tag = 'input window, operand 1, single buffered']
    #allocation3 [shape = 's32[1]{0}', space=sflag, size = 0x4, scoped, tag = 'scoped memory for tpu_custom_call.1']
    #allocation4 [shape = 's32[1]{0}', space=sflag, size = 0x4, scoped, tag = 'scoped memory for tpu_custom_call.1']
    #allocation5 [shape = 'u8[262144]{0}', space=vmem, size = 0x40000, scoped, tag = 'input window, operand 3, single buffered']
    #allocation6 [shape = 's32[1]{0}', space=sflag, size = 0x4, scoped, tag = 'scoped memory for tpu_custom_call.1']
    #allocation7 [shape = 'u8[4096]{0}', space=vmem, size = 0x1000, scoped, tag = 'output window, operand 0, single buffered']
    %14 = vsyncpa [#allocation3], 0
    %15 = vsyncpa [#allocation6], 0
    %16 = vsyncpa [#allocation4], 0
    // Predicated region
    $region2: #{tpu_custom_call.1} parent=1 // pred_check
      _
    $region3: #{tpu_custom_call.1} parent=1 // pred_check_branch
      %18 = sbr.rel (0) target = $region5
    $region4: #{tpu_custom_call.1} parent=1 // pred_region
      _
    $region5: #{tpu_custom_call.1} parent=1 // pred_fallthru
      _
    // Predicated region
    $region6: #{tpu_custom_call.1} parent=1 // pred_check
      _
    $region7: #{tpu_custom_call.1} parent=1 // pred_check_branch
      %20 = sbr.rel (0) target = $region9
    $region8: #{tpu_custom_call.1} parent=1 // pred_region
      %s22 = ssub.s32 8192, 8192
      %23 = vsyncadd [#allocation3], %s22
      %s24 = sshll.u32 [#allocation2], 4
      %s25 = int_to_ptr.vmem [resolvable:$true] %s24
      %30 = dma.hbm_to_vmem [thread:$0]  %s1, 8192, %s25, [#allocation3], 512, 512, 32
    $region9: #{tpu_custom_call.1} parent=1 // pred_fallthru
      _
    // Predicated region
    $region10: #{tpu_custom_call.1} parent=1 // pred_check
      _
    $region11: #{tpu_custom_call.1} parent=1 // pred_check_branch
      %32 = sbr.rel (0) target = $region13
    $region12: #{tpu_custom_call.1} parent=1 // pred_region
      _
    $region13: #{tpu_custom_call.1} parent=1 // pred_fallthru
      _
    // Predicated region
    $region14: #{tpu_custom_call.1} parent=1 // pred_check
      _
    $region15: #{tpu_custom_call.1} parent=1 // pred_check_branch
      %34 = sbr.rel (0) target = $region17
    $region16: #{tpu_custom_call.1} parent=1 // pred_region
      %s36 = ssub.s32 8192, 8192
      %37 = vsyncadd [#allocation6], %s36
      %s38 = sshll.u32 [#allocation5], 4
      %s39 = int_to_ptr.vmem [resolvable:$true] %s38
      %44 = dma.hbm_to_vmem [thread:$0]  %s3, 8192, %s39, [#allocation6], 128, 128, 8
    $region17: #{tpu_custom_call.1} parent=1 // pred_fallthru
      _
    // Predicated region
    $region18: #{tpu_custom_call.1} parent=1 // pred_check
      _
    $region19: #{tpu_custom_call.1} parent=1 // pred_check_branch
      %46 = sbr.rel (0) target = $region21
    $region20: #{tpu_custom_call.1} parent=1 // pred_region
      _
    $region21: #{tpu_custom_call.1} parent=1 // pred_fallthru
      _
    // Predicated region
    $region22: #{tpu_custom_call.1} parent=1 // pred_check
      _
    $region23: #{tpu_custom_call.1} parent=1 // pred_check_branch
      %48 = sbr.rel (0) target = $region25
    $region24: #{tpu_custom_call.1} parent=1 // pred_region
      _
    $region25: #{tpu_custom_call.1} parent=1 // pred_fallthru
      _
    // Predicated region
    $region26: #{tpu_custom_call.1} parent=1 // pred_check
      _
    $region27: #{tpu_custom_call.1} parent=1 // pred_check_branch
      %50 = sbr.rel (0) target = $region29
    $region28: #{tpu_custom_call.1} parent=1 // pred_region
      _
    $region29: #{tpu_custom_call.1} parent=1 // pred_fallthru
      _
    // Predicated region
    $region30: #{tpu_custom_call.1} parent=1 // pred_check
      _
    $region31: #{tpu_custom_call.1} parent=1 // pred_check_branch
      %52 = sbr.rel (0) target = $region33
    $region32: #{tpu_custom_call.1} parent=1 // pred_region
      _
    $region33: #{tpu_custom_call.1} parent=1 // pred_fallthru
      _
    // Predicated region
    $region34: #{tpu_custom_call.1} parent=1 // pred_check
      _
    $region35: #{tpu_custom_call.1} parent=1 // pred_check_branch
      %54 = sbr.rel (0) target = $region37
    $region36: #{tpu_custom_call.1} parent=1 // pred_region
      _
    $region37: #{tpu_custom_call.1} parent=1 // pred_fallthru
      _
    // Predicated region
    $region38: #{tpu_custom_call.1} parent=1 // pred_check
      _
    $region39: #{tpu_custom_call.1} parent=1 // pred_check_branch
      %56 = sbr.rel (0) target = $region41
    $region40: #{tpu_custom_call.1} parent=1 // pred_region
      %57 = dma.done [#allocation3], 8192
    $region41: #{tpu_custom_call.1} parent=1 // pred_fallthru
      _
    // Predicated region
    $region42: #{tpu_custom_call.1} parent=1 // pred_check
      _
    $region43: #{tpu_custom_call.1} parent=1 // pred_check_branch
      %59 = sbr.rel (0) target = $region45
    $region44: #{tpu_custom_call.1} parent=1 // pred_region
      %60 = dma.done [#allocation6], 8192
    $region45: #{tpu_custom_call.1} parent=1 // pred_fallthru
      _
    %v61 = vld [vmem:[%s0] sm:$0xff]
    %v62 = vld [vmem:[#allocation2] sm:$0xff]
    %v63 = vld [vmem:[#allocation2 + $0x8] sm:$0xff]
    %v64 = vld [vmem:[#allocation2 + $0x10] sm:$0xff]
    %v65 = vld [vmem:[#allocation2 + $0x18] sm:$0xff]
    %v66 = vld [vmem:[#allocation2 + $0x20] sm:$0xff]
    %v67 = vld [vmem:[#allocation2 + $0x28] sm:$0xff]
    %v68 = vld [vmem:[#allocation2 + $0x30] sm:$0xff]
    %v69 = vld [vmem:[#allocation2 + $0x38] sm:$0xff]
    %v70 = vld [vmem:[#allocation2 + $0x40] sm:$0xff]
    %v71 = vld [vmem:[#allocation2 + $0x48] sm:$0xff]
    %v72 = vld [vmem:[#allocation2 + $0x50] sm:$0xff]
    %v73 = vld [vmem:[#allocation2 + $0x58] sm:$0xff]
    %v74 = vld [vmem:[#allocation2 + $0x60] sm:$0xff]
    %v75 = vld [vmem:[#allocation2 + $0x68] sm:$0xff]
    %v76 = vld [vmem:[#allocation2 + $0x70] sm:$0xff]
    %v77 = vld [vmem:[#allocation2 + $0x78] sm:$0xff]
    %v78 = vld [vmem:[#allocation2 + $0x80] sm:$0xff]
    %v79 = vld [vmem:[#allocation2 + $0x88] sm:$0xff]
    %v80 = vld [vmem:[#allocation2 + $0x90] sm:$0xff]
    %v81 = vld [vmem:[#allocation2 + $0x98] sm:$0xff]
    %v82 = vld [vmem:[#allocation2 + $0xa0] sm:$0xff]
    %v83 = vld [vmem:[#allocation2 + $0xa8] sm:$0xff]
    %v84 = vld [vmem:[#allocation2 + $0xb0] sm:$0xff]
    %v85 = vld [vmem:[#allocation2 + $0xb8] sm:$0xff]
    %v86 = vld [vmem:[#allocation2 + $0xc0] sm:$0xff]
    %v87 = vld [vmem:[#allocation2 + $0xc8] sm:$0xff]
    %v88 = vld [vmem:[#allocation2 + $0xd0] sm:$0xff]
    %v89 = vld [vmem:[#allocation2 + $0xd8] sm:$0xff]
    %v90 = vld [vmem:[#allocation2 + $0xe0] sm:$0xff]
    %v91 = vld [vmem:[#allocation2 + $0xe8] sm:$0xff]
    %v92 = vld [vmem:[#allocation2 + $0xf0] sm:$0xff]
    %v93 = vld [vmem:[#allocation2 + $0xf8] sm:$0xff]
    %v94 = vld [vmem:[#allocation2 + $0x100] sm:$0xff]
    %v95 = vld [vmem:[#allocation2 + $0x108] sm:$0xff]
    %v96 = vld [vmem:[#allocation2 + $0x110] sm:$0xff]
    %v97 = vld [vmem:[#allocation2 + $0x118] sm:$0xff]
    %v98 = vld [vmem:[#allocation2 + $0x120] sm:$0xff]
    %v99 = vld [vmem:[#allocation2 + $0x128] sm:$0xff]
    %v100 = vld [vmem:[#allocation2 + $0x130] sm:$0xff]
    %v101 = vld [vmem:[#allocation2 + $0x138] sm:$0xff]
    %v102 = vld [vmem:[#allocation2 + $0x140] sm:$0xff]
    %v103 = vld [vmem:[#allocation2 + $0x148] sm:$0xff]
    %v104 = vld [vmem:[#allocation2 + $0x150] sm:$0xff]
    %v105 = vld [vmem:[#allocation2 + $0x158] sm:$0xff]
    %v106 = vld [vmem:[#allocation2 + $0x160] sm:$0xff]
    %v107 = vld [vmem:[#allocation2 + $0x168] sm:$0xff]
    %v108 = vld [vmem:[#allocation2 + $0x170] sm:$0xff]
    %v109 = vld [vmem:[#allocation2 + $0x178] sm:$0xff]
    %v110 = vld [vmem:[#allocation2 + $0x180] sm:$0xff]
    %v111 = vld [vmem:[#allocation2 + $0x188] sm:$0xff]
    %v112 = vld [vmem:[#allocation2 + $0x190] sm:$0xff]
    %v113 = vld [vmem:[#allocation2 + $0x198] sm:$0xff]
    %v114 = vld [vmem:[#allocation2 + $0x1a0] sm:$0xff]
    %v115 = vld [vmem:[#allocation2 + $0x1a8] sm:$0xff]
    %v116 = vld [vmem:[#allocation2 + $0x1b0] sm:$0xff]
    %v117 = vld [vmem:[#allocation2 + $0x1b8] sm:$0xff]
    %v118 = vld [vmem:[#allocation2 + $0x1c0] sm:$0xff]
    %v119 = vld [vmem:[#allocation2 + $0x1c8] sm:$0xff]
    %v120 = vld [vmem:[#allocation2 + $0x1d0] sm:$0xff]
    %v121 = vld [vmem:[#allocation2 + $0x1d8] sm:$0xff]
    %v122 = vld [vmem:[#allocation2 + $0x1e0] sm:$0xff]
    %v123 = vld [vmem:[#allocation2 + $0x1e8] sm:$0xff]
    %v124 = vld [vmem:[#allocation2 + $0x1f0] sm:$0xff]
    %v125 = vld [vmem:[#allocation2 + $0x1f8] sm:$0xff]
    %126 = vmatprep.subr.mxu0 %v123
    %127 = vmatpush1.msra.mxu0 %v122
    %128 = vmatprep.subr.mxu0 %v119
    %129 = vmatpush1.msra.mxu0 %v118
    %130 = vmatprep.subr.mxu0 %v115
    %131 = vmatpush1.msra.mxu0 %v114
    %132 = vmatprep.subr.mxu0 %v111
    %133 = vmatpush1.msra.mxu0 %v110
    %134 = vmatprep.subr.mxu0 %v107
    %135 = vmatpush1.msra.mxu0 %v106
    %136 = vmatprep.subr.mxu0 %v103
    %137 = vmatpush1.msra.mxu0 %v102
    %138 = vmatprep.subr.mxu0 %v99
    %139 = vmatpush1.msra.mxu0 %v98
    %140 = vmatprep.subr.mxu0 %v95
    %141 = vmatpush1.msra.mxu0 %v94
    %142 = vmatprep.subr.mxu0 %v91
    %143 = vmatpush1.msra.mxu0 %v90
    %144 = vmatprep.subr.mxu0 %v87
    %145 = vmatpush1.msra.mxu0 %v86
    %146 = vmatprep.subr.mxu0 %v83
    %147 = vmatpush1.msra.mxu0 %v82
    %148 = vmatprep.subr.mxu0 %v79
    %149 = vmatpush1.msra.mxu0 %v78
    %150 = vmatprep.subr.mxu0 %v75
    %151 = vmatpush1.msra.mxu0 %v74
    %152 = vmatprep.subr.mxu0 %v71
    %153 = vmatpush1.msra.mxu0 %v70
    %154 = vmatprep.subr.mxu0 %v67
    %155 = vmatpush1.msra.mxu0 %v66
    %156 = vmatprep.subr.mxu0 %v63
    %157 = vmatpush1.msra.mxu0 %v62
    %158 = vmatprep.subr.mxu0 0.0
    %159 = vmatpush2.msra.mxu0 0.0
    %160 = vmatprep.subr.mxu0 0.0
    %161 = vmatpush2.msra.mxu0 0.0
    %162 = vmatprep.subr.mxu0 0.0
    %163 = vmatpush2.msra.mxu0 0.0
    %164 = vmatprep.subr.mxu0 0.0
    %165 = vmatpush2.msra.mxu0 0.0
    %166 = vmatprep.subr.mxu0 0.0
    %167 = vmatpush2.msra.mxu0 0.0
    %168 = vmatprep.subr.mxu0 0.0
    %169 = vmatpush2.msra.mxu0 0.0
    %170 = vmatprep.subr.mxu0 0.0
    %171 = vmatpush2.msra.mxu0 0.0
    %172 = vmatprep.subr.mxu0 0.0
    %173 = vmatpush2.msra.mxu0 0.0
    %174 = vmatprep.subr.mxu0 0.0
    %175 = vmatpush2.msra.mxu0 0.0
    %176 = vmatprep.subr.mxu0 0.0
    %177 = vmatpush2.msra.mxu0 0.0
    %178 = vmatprep.subr.mxu0 0.0
    %179 = vmatpush2.msra.mxu0 0.0
    %180 = vmatprep.subr.mxu0 0.0
    %181 = vmatpush2.msra.mxu0 0.0
    %182 = vmatprep.subr.mxu0 0.0
    %183 = vmatpush2.msra.mxu0 0.0
    %184 = vmatprep.subr.mxu0 0.0
    %185 = vmatpush2.msra.mxu0 0.0
    %186 = vmatprep.subr.mxu0 0.0
    %187 = vmatpush2.msra.mxu0 0.0
    %188 = vmatprep.subr.mxu0 0.0
    %189 = vmatpush2.msra.mxu0 0.0
    %190 = vmatprep.mubr.f32.mxu0 0.0
    %191 = vmatmul.mubr.f32.gmra.mxu0 %v61
    %v192 = vpop.f32.mrf.mxu0
    %v193 = vadd.f32 0.0, %v192
    %v194 = vpop.f32.mrf.mxu0
    %v195 = vadd.f32 0.0, %v194
    %196 = vdwg.mxu0
    %197 = vmatprep.subr.mxu0 %v125
    %198 = vmatpush1.msra.mxu0 %v124
    %199 = vmatprep.subr.mxu0 %v121
    %200 = vmatpush1.msra.mxu0 %v120
    %201 = vmatprep.subr.mxu0 %v117
    %202 = vmatpush1.msra.mxu0 %v116
    %203 = vmatprep.subr.mxu0 %v113
    %204 = vmatpush1.msra.mxu0 %v112
    %205 = vmatprep.subr.mxu0 %v109
    %206 = vmatpush1.msra.mxu0 %v108
    %207 = vmatprep.subr.mxu0 %v105
    %208 = vmatpush1.msra.mxu0 %v104
    %209 = vmatprep.subr.mxu0 %v101
    %210 = vmatpush1.msra.mxu0 %v100
    %211 = vmatprep.subr.mxu0 %v97
    %212 = vmatpush1.msra.mxu0 %v96
    %213 = vmatprep.subr.mxu0 %v93
    %214 = vmatpush1.msra.mxu0 %v92
    %215 = vmatprep.subr.mxu0 %v89
    %216 = vmatpush1.msra.mxu0 %v88
    %217 = vmatprep.subr.mxu0 %v85
    %218 = vmatpush1.msra.mxu0 %v84
    %219 = vmatprep.subr.mxu0 %v81
    %220 = vmatpush1.msra.mxu0 %v80
    %221 = vmatprep.subr.mxu0 %v77
    %222 = vmatpush1.msra.mxu0 %v76
    %223 = vmatprep.subr.mxu0 %v73
    %224 = vmatpush1.msra.mxu0 %v72
    %225 = vmatprep.subr.mxu0 %v69
    %226 = vmatpush1.msra.mxu0 %v68
    %227 = vmatprep.subr.mxu0 %v65
    %228 = vmatpush1.msra.mxu0 %v64
    %229 = vmatprep.subr.mxu0 0.0
    %230 = vmatpush2.msra.mxu0 0.0
    %231 = vmatprep.subr.mxu0 0.0
    %232 = vmatpush2.msra.mxu0 0.0
    %233 = vmatprep.subr.mxu0 0.0
    %234 = vmatpush2.msra.mxu0 0.0
    %235 = vmatprep.subr.mxu0 0.0
    %236 = vmatpush2.msra.mxu0 0.0
    %237 = vmatprep.subr.mxu0 0.0
    %238 = vmatpush2.msra.mxu0 0.0
    %239 = vmatprep.subr.mxu0 0.0
    %240 = vmatpush2.msra.mxu0 0.0
    %241 = vmatprep.subr.mxu0 0.0
    %242 = vmatpush2.msra.mxu0 0.0
    %243 = vmatprep.subr.mxu0 0.0
    %244 = vmatpush2.msra.mxu0 0.0
    %245 = vmatprep.subr.mxu0 0.0
    %246 = vmatpush2.msra.mxu0 0.0
    %247 = vmatprep.subr.mxu0 0.0
    %248 = vmatpush2.msra.mxu0 0.0
    %249 = vmatprep.subr.mxu0 0.0
    %250 = vmatpush2.msra.mxu0 0.0
    %251 = vmatprep.subr.mxu0 0.0
    %252 = vmatpush2.msra.mxu0 0.0
    %253 = vmatprep.subr.mxu0 0.0
    %254 = vmatpush2.msra.mxu0 0.0
    %255 = vmatprep.subr.mxu0 0.0
    %256 = vmatpush2.msra.mxu0 0.0
    %257 = vmatprep.subr.mxu0 0.0
    %258 = vmatpush2.msra.mxu0 0.0
    %259 = vmatprep.subr.mxu0 0.0
    %260 = vmatpush2.msra.mxu0 0.0
    %261 = vmatprep.mubr.f32.mxu0 0.0
    %262 = vmatmul.mubr.f32.gmra.mxu0 %v61
    %v263 = vpop.f32.mrf.mxu0
    %v264 = vadd.f32 0.0, %v263
    %v265 = vpop.f32.mrf.mxu0
    %v266 = vadd.f32 0.0, %v265
    %267 = vdwg.mxu0
    %v268 = vrot.slane %v193, 4
    %v269 = vadd.f32 %v193, %v268
    %v270 = vrot.slane %v269, 2
    %v271 = vadd.f32 %v269, %v270
    %v272 = vrot.slane %v271, 1
    %v273 = vadd.f32 %v271, %v272
    %v274 = vrot.slane %v195, 4
    %v275 = vadd.f32 %v195, %v274
    %v276 = vrot.slane %v275, 2
    %v277 = vadd.f32 %v275, %v276
    %v278 = vrot.slane %v277, 1
    %v279 = vadd.f32 %v277, %v278
    %v280 = vrot.slane %v264, 4
    %v281 = vadd.f32 %v264, %v280
    %v282 = vrot.slane %v281, 2
    %v283 = vadd.f32 %v281, %v282
    %v284 = vrot.slane %v283, 1
    %v285 = vadd.f32 %v283, %v284
    %v286 = vrot.slane %v266, 4
    %v287 = vadd.f32 %v266, %v286
    %v288 = vrot.slane %v287, 2
    %v289 = vadd.f32 %v287, %v288
    %v290 = vrot.slane %v289, 1
    %v291 = vadd.f32 %v289, %v290
    %v292 = vmul.f32 %v193, %v193
    %v293 = vmul.f32 %v195, %v195
    %v294 = vmul.f32 %v264, %v264
    %v295 = vmul.f32 %v266, %v266
    %v296 = vrot.slane %v292, 4
    %v297 = vadd.f32 %v292, %v296
    %v298 = vrot.slane %v297, 2
    %v299 = vadd.f32 %v297, %v298
    %v300 = vrot.slane %v299, 1
    %v301 = vadd.f32 %v299, %v300
    %v302 = vrot.slane %v293, 4
    %v303 = vadd.f32 %v293, %v302
    %v304 = vrot.slane %v303, 2
    %v305 = vadd.f32 %v303, %v304
    %v306 = vrot.slane %v305, 1
    %v307 = vadd.f32 %v305, %v306
    %v308 = vrot.slane %v294, 4
    %v309 = vadd.f32 %v294, %v308
    %v310 = vrot.slane %v309, 2
    %v311 = vadd.f32 %v309, %v310
    %v312 = vrot.slane %v311, 1
    %v313 = vadd.f32 %v311, %v312
    %v314 = vrot.slane %v295, 4
    %v315 = vadd.f32 %v295, %v314
    %v316 = vrot.slane %v315, 2
    %v317 = vadd.f32 %v315, %v316
    %v318 = vrot.slane %v317, 1
    %v319 = vadd.f32 %v317, %v318
    %v320 = vmul.f32 %v273, 0.125
    %v321 = vmul.f32 %v279, 0.125
    %v322 = vmul.f32 %v285, 0.125
    %v323 = vmul.f32 %v291, 0.125
    %v324 = vmul.f32 %v301, 0.125
    %v325 = vmul.f32 %v307, 0.125
    %v326 = vmul.f32 %v313, 0.125
    %v327 = vmul.f32 %v319, 0.125
    %v328 = vmul.f32 %v320, %v320
    %v329 = vmul.f32 %v321, %v321
    %v330 = vmul.f32 %v322, %v322
    %v331 = vmul.f32 %v323, %v323
    %v332 = vsub.f32 %v324, %v328
    %v333 = vsub.f32 %v325, %v329
    %v334 = vsub.f32 %v326, %v330
    %v335 = vsub.f32 %v327, %v331
    %v336 = vmax.f32 %v332, 0.0
    %v337 = vmax.f32 %v333, 0.0
    %v338 = vmax.f32 %v334, 0.0
    %v339 = vmax.f32 %v335, 0.0
    %v340 = vadd.f32 %v336, 1e-05
    %v341 = vadd.f32 %v337, 1e-05
    %v342 = vadd.f32 %v338, 1e-05
    %v343 = vadd.f32 %v339, 1e-05
    %v344 = vrsqrt.pop %v340
    %v345 = vrsqrt.pop %v341
    %v346 = vrsqrt.pop %v342
    %v347 = vrsqrt.pop %v343
    %v348 = vld [vmem:[%s2] ss:$2 sm:$0xf]
    %s349 = scalar_lea.vmem %s2, 1
    %v350 = vld [vmem:[%s349] ss:$2 sm:$0xf]
    %v355 = vcombine.low %v344, %v345
    %v356 = vcombine.low %v346, %v347
    %v358 = vunpack.c.l.s4 1966171168
    %v359 = vunpack.c.0.s8 %v358
    %v360 = vlaneseq
    %v361 = vshrl.u32 %v360, 7
    %v362 = vsub.s32 %v359, %v361
    %v363 = vrot.slane %v355, %v362
    %v365 = vunpack.c.l.s4 1966171168
    %v366 = vunpack.c.0.s8 %v365
    %v367 = vlaneseq
    %v368 = vshrl.u32 %v367, 7
    %v369 = vsub.s32 %v366, %v368
    %v370 = vrot.slane %v356, %v369
    %v371 = vcombine.low %v363, %v370
    %v373 = vunpack.c.l.s4 1966171168
    %v374 = vunpack.c.0.s8 %v373
    %v375 = vlaneseq
    %v376 = vshrl.u32 %v375, 7
    %v377 = vsub.s32 %v374, %v376
    %v378 = vrot.slane %v371, %v377
    %v380 = vmul.f32 %v348, %v378
    %v382 = vlaneseq
    %v383 = vshrl.u32 %v382, 7
    %v384 = vsub.s32 0, %v383
    %v385 = vrot.slane %v380, %v384
    %v386 = vlaneseq
    %v387 = vshrl.u32 %v386, 7
    %v388 = vsub.s32 1, %v387
    %v389 = vrot.slane %v380, %v388
    %v390 = vlaneseq
    %v391 = vshrl.u32 %v390, 7
    %v392 = vsub.s32 2, %v391
    %v393 = vrot.slane %v380, %v392
    %v394 = vlaneseq
    %v395 = vshrl.u32 %v394, 7
    %v396 = vsub.s32 3, %v395
    %v397 = vrot.slane %v380, %v396
    %v402 = vmul.f32 %v320, %v385
    %v403 = vmul.f32 %v321, %v389
    %v404 = vmul.f32 %v322, %v393
    %v405 = vmul.f32 %v323, %v397
    %v410 = vcombine.low %v402, %v403
    %v411 = vcombine.low %v404, %v405
    %v413 = vunpack.c.l.s4 1966171168
    %v414 = vunpack.c.0.s8 %v413
    %v415 = vlaneseq
    %v416 = vshrl.u32 %v415, 7
    %v417 = vsub.s32 %v414, %v416
    %v418 = vrot.slane %v410, %v417
    %v420 = vunpack.c.l.s4 1966171168
    %v421 = vunpack.c.0.s8 %v420
    %v422 = vlaneseq
    %v423 = vshrl.u32 %v422, 7
    %v424 = vsub.s32 %v421, %v423
    %v425 = vrot.slane %v411, %v424
    %v426 = vcombine.low %v418, %v425
    %v428 = vunpack.c.l.s4 1966171168
    %v429 = vunpack.c.0.s8 %v428
    %v430 = vlaneseq
    %v431 = vshrl.u32 %v430, 7
    %v432 = vsub.s32 %v429, %v431
    %v433 = vrot.slane %v426, %v432
    %v435 = vsub.f32 %v350, %v433
    %v436 = vmul.f32 %v193, %v385
    %v437 = vmul.f32 %v195, %v389
    %v438 = vmul.f32 %v264, %v393
    %v439 = vmul.f32 %v266, %v397
    %v441 = vlaneseq
    %v442 = vshrl.u32 %v441, 7
    %v443 = vsub.s32 0, %v442
    %v444 = vrot.slane %v435, %v443
    %v445 = vlaneseq
    %v446 = vshrl.u32 %v445, 7
    %v447 = vsub.s32 1, %v446
    %v448 = vrot.slane %v435, %v447
    %v449 = vlaneseq
    %v450 = vshrl.u32 %v449, 7
    %v451 = vsub.s32 2, %v450
    %v452 = vrot.slane %v435, %v451
    %v453 = vlaneseq
    %v454 = vshrl.u32 %v453, 7
    %v455 = vsub.s32 3, %v454
    %v456 = vrot.slane %v435, %v455
    %v461 = vadd.f32 %v436, %v444
    %v462 = vadd.f32 %v437, %v448
    %v463 = vadd.f32 %v438, %v452
    %v464 = vadd.f32 %v439, %v456
    %v465 = vmax.f32 %v461, 0.0
    %v466 = vmax.f32 %v462, 0.0
    %v467 = vmax.f32 %v463, 0.0
    %v468 = vmax.f32 %v464, 0.0
    %v469 = vld [vmem:[#allocation5] sm:$0xff]
    %v470 = vld [vmem:[#allocation5 + $0x8] sm:$0xff]
    %v471 = vld [vmem:[#allocation5 + $0x10] sm:$0xff]
    %v472 = vld [vmem:[#allocation5 + $0x18] sm:$0xff]
    %v473 = vld [vmem:[#allocation5 + $0x20] sm:$0xff]
    %v474 = vld [vmem:[#allocation5 + $0x28] sm:$0xff]
    %v475 = vld [vmem:[#allocation5 + $0x30] sm:$0xff]
    %v476 = vld [vmem:[#allocation5 + $0x38] sm:$0xff]
    %v477 = vld [vmem:[#allocation5 + $0x40] sm:$0xff]
    %v478 = vld [vmem:[#allocation5 + $0x48] sm:$0xff]
    %v479 = vld [vmem:[#allocation5 + $0x50] sm:$0xff]
    %v480 = vld [vmem:[#allocation5 + $0x58] sm:$0xff]
    %v481 = vld [vmem:[#allocation5 + $0x60] sm:$0xff]
    %v482 = vld [vmem:[#allocation5 + $0x68] sm:$0xff]
    %v483 = vld [vmem:[#allocation5 + $0x70] sm:$0xff]
    %v484 = vld [vmem:[#allocation5 + $0x78] sm:$0xff]
    %v485 = vld [vmem:[#allocation5 + $0x80] sm:$0xff]
    %v486 = vld [vmem:[#allocation5 + $0x88] sm:$0xff]
    %v487 = vld [vmem:[#allocation5 + $0x90] sm:$0xff]
    %v488 = vld [vmem:[#allocation5 + $0x98] sm:$0xff]
    %v489 = vld [vmem:[#allocation5 + $0xa0] sm:$0xff]
    %v490 = vld [vmem:[#allocation5 + $0xa8] sm:$0xff]
    %v491 = vld [vmem:[#allocation5 + $0xb0] sm:$0xff]
    %v492 = vld [vmem:[#allocation5 + $0xb8] sm:$0xff]
    %v493 = vld [vmem:[#allocation5 + $0xc0] sm:$0xff]
    %v494 = vld [vmem:[#allocation5 + $0xc8] sm:$0xff]
    %v495 = vld [vmem:[#allocation5 + $0xd0] sm:$0xff]
    %v496 = vld [vmem:[#allocation5 + $0xd8] sm:$0xff]
    %v497 = vld [vmem:[#allocation5 + $0xe0] sm:$0xff]
    %v498 = vld [vmem:[#allocation5 + $0xe8] sm:$0xff]
    %v499 = vld [vmem:[#allocation5 + $0xf0] sm:$0xff]
    %v500 = vld [vmem:[#allocation5 + $0xf8] sm:$0xff]
    %v501 = vld [vmem:[#allocation5 + $0x100] sm:$0xff]
    %v502 = vld [vmem:[#allocation5 + $0x108] sm:$0xff]
    %v503 = vld [vmem:[#allocation5 + $0x110] sm:$0xff]
    %v504 = vld [vmem:[#allocation5 + $0x118] sm:$0xff]
    %v505 = vld [vmem:[#allocation5 + $0x120] sm:$0xff]
    %v506 = vld [vmem:[#allocation5 + $0x128] sm:$0xff]
    %v507 = vld [vmem:[#allocation5 + $0x130] sm:$0xff]
    %v508 = vld [vmem:[#allocation5 + $0x138] sm:$0xff]
    %v509 = vld [vmem:[#allocation5 + $0x140] sm:$0xff]
    %v510 = vld [vmem:[#allocation5 + $0x148] sm:$0xff]
    %v511 = vld [vmem:[#allocation5 + $0x150] sm:$0xff]
    %v512 = vld [vmem:[#allocation5 + $0x158] sm:$0xff]
    %v513 = vld [vmem:[#allocation5 + $0x160] sm:$0xff]
    %v514 = vld [vmem:[#allocation5 + $0x168] sm:$0xff]
    %v515 = vld [vmem:[#allocation5 + $0x170] sm:$0xff]
    %v516 = vld [vmem:[#allocation5 + $0x178] sm:$0xff]
    %v517 = vld [vmem:[#allocation5 + $0x180] sm:$0xff]
    %v518 = vld [vmem:[#allocation5 + $0x188] sm:$0xff]
    %v519 = vld [vmem:[#allocation5 + $0x190] sm:$0xff]
    %v520 = vld [vmem:[#allocation5 + $0x198] sm:$0xff]
    %v521 = vld [vmem:[#allocation5 + $0x1a0] sm:$0xff]
    %v522 = vld [vmem:[#allocation5 + $0x1a8] sm:$0xff]
    %v523 = vld [vmem:[#allocation5 + $0x1b0] sm:$0xff]
    %v524 = vld [vmem:[#allocation5 + $0x1b8] sm:$0xff]
    %v525 = vld [vmem:[#allocation5 + $0x1c0] sm:$0xff]
    %v526 = vld [vmem:[#allocation5 + $0x1c8] sm:$0xff]
    %v527 = vld [vmem:[#allocation5 + $0x1d0] sm:$0xff]
    %v528 = vld [vmem:[#allocation5 + $0x1d8] sm:$0xff]
    %v529 = vld [vmem:[#allocation5 + $0x1e0] sm:$0xff]
    %v530 = vld [vmem:[#allocation5 + $0x1e8] sm:$0xff]
    %v531 = vld [vmem:[#allocation5 + $0x1f0] sm:$0xff]
    %v532 = vld [vmem:[#allocation5 + $0x1f8] sm:$0xff]
    %533 = vmatprep.subr.mxu0 0.0
    %534 = vmatpush1.msra.mxu0 %v484
    %535 = vmatprep.subr.mxu0 0.0
    %536 = vmatpush1.msra.mxu0 %v483
    %537 = vmatprep.subr.mxu0 0.0
    %538 = vmatpush1.msra.mxu0 %v482
    %539 = vmatprep.subr.mxu0 0.0
    %540 = vmatpush1.msra.mxu0 %v481
    %541 = vmatprep.subr.mxu0 0.0
    %542 = vmatpush1.msra.mxu0 %v480
    %543 = vmatprep.subr.mxu0 0.0
    %544 = vmatpush1.msra.mxu0 %v479
    %545 = vmatprep.subr.mxu0 0.0
    %546 = vmatpush1.msra.mxu0 %v478
    %547 = vmatprep.subr.mxu0 0.0
    %548 = vmatpush1.msra.mxu0 %v477
    %549 = vmatprep.subr.mxu0 0.0
    %550 = vmatpush1.msra.mxu0 %v476
    %551 = vmatprep.subr.mxu0 0.0
    %552 = vmatpush1.msra.mxu0 %v475
    %553 = vmatprep.subr.mxu0 0.0
    %554 = vmatpush1.msra.mxu0 %v474
    %555 = vmatprep.subr.mxu0 0.0
    %556 = vmatpush1.msra.mxu0 %v473
    %557 = vmatprep.subr.mxu0 0.0
    %558 = vmatpush1.msra.mxu0 %v472
    %559 = vmatprep.subr.mxu0 0.0
    %560 = vmatpush1.msra.mxu0 %v471
    %561 = vmatprep.subr.mxu0 0.0
    %562 = vmatpush1.msra.mxu0 %v470
    %563 = vmatprep.subr.mxu0 0.0
    %564 = vmatpush1.msra.mxu0 %v469
    %565 = vmatprep.subr.mxu0 0.0
    %566 = vmatpush2.msra.mxu0 %v500
    %567 = vmatprep.subr.mxu0 0.0
    %568 = vmatpush2.msra.mxu0 %v499
    %569 = vmatprep.subr.mxu0 0.0
    %570 = vmatpush2.msra.mxu0 %v498
    %571 = vmatprep.subr.mxu0 0.0
    %572 = vmatpush2.msra.mxu0 %v497
    %573 = vmatprep.subr.mxu0 0.0
    %574 = vmatpush2.msra.mxu0 %v496
    %575 = vmatprep.subr.mxu0 0.0
    %576 = vmatpush2.msra.mxu0 %v495
    %577 = vmatprep.subr.mxu0 0.0
    %578 = vmatpush2.msra.mxu0 %v494
    %579 = vmatprep.subr.mxu0 0.0
    %580 = vmatpush2.msra.mxu0 %v493
    %581 = vmatprep.subr.mxu0 0.0
    %582 = vmatpush2.msra.mxu0 %v492
    %583 = vmatprep.subr.mxu0 0.0
    %584 = vmatpush2.msra.mxu0 %v491
    %585 = vmatprep.subr.mxu0 0.0
    %586 = vmatpush2.msra.mxu0 %v490
    %587 = vmatprep.subr.mxu0 0.0
    %588 = vmatpush2.msra.mxu0 %v489
    %589 = vmatprep.subr.mxu0 0.0
    %590 = vmatpush2.msra.mxu0 %v488
    %591 = vmatprep.subr.mxu0 0.0
    %592 = vmatpush2.msra.mxu0 %v487
    %593 = vmatprep.subr.mxu0 0.0
    %594 = vmatpush2.msra.mxu0 %v486
    %595 = vmatprep.subr.mxu0 0.0
    %596 = vmatpush2.msra.mxu0 %v485
    %597 = vmatprep.mubr.f32.mxu0 %v466
    %598 = vmatmul.mubr.f32.gmra.mxu0 %v465
    %v599 = vpop.f32.mrf.mxu0
    %v600 = vadd.f32 0.0, %v599
    %v601 = vpop.f32.mrf.mxu0
    %602 = vdwg.mxu0
    %603 = vmatprep.subr.mxu0 0.0
    %604 = vmatpush1.msra.mxu0 %v516
    %605 = vmatprep.subr.mxu0 0.0
    %606 = vmatpush1.msra.mxu0 %v515
    %607 = vmatprep.subr.mxu0 0.0
    %608 = vmatpush1.msra.mxu0 %v514
    %609 = vmatprep.subr.mxu0 0.0
    %610 = vmatpush1.msra.mxu0 %v513
    %611 = vmatprep.subr.mxu0 0.0
    %612 = vmatpush1.msra.mxu0 %v512
    %613 = vmatprep.subr.mxu0 0.0
    %614 = vmatpush1.msra.mxu0 %v511
    %615 = vmatprep.subr.mxu0 0.0
    %616 = vmatpush1.msra.mxu0 %v510
    %617 = vmatprep.subr.mxu0 0.0
    %618 = vmatpush1.msra.mxu0 %v509
    %619 = vmatprep.subr.mxu0 0.0
    %620 = vmatpush1.msra.mxu0 %v508
    %621 = vmatprep.subr.mxu0 0.0
    %622 = vmatpush1.msra.mxu0 %v507
    %623 = vmatprep.subr.mxu0 0.0
    %624 = vmatpush1.msra.mxu0 %v506
    %625 = vmatprep.subr.mxu0 0.0
    %626 = vmatpush1.msra.mxu0 %v505
    %627 = vmatprep.subr.mxu0 0.0
    %628 = vmatpush1.msra.mxu0 %v504
    %629 = vmatprep.subr.mxu0 0.0
    %630 = vmatpush1.msra.mxu0 %v503
    %631 = vmatprep.subr.mxu0 0.0
    %632 = vmatpush1.msra.mxu0 %v502
    %633 = vmatprep.subr.mxu0 0.0
    %634 = vmatpush1.msra.mxu0 %v501
    %635 = vmatprep.subr.mxu0 0.0
    %636 = vmatpush2.msra.mxu0 %v532
    %637 = vmatprep.subr.mxu0 0.0
    %638 = vmatpush2.msra.mxu0 %v531
    %639 = vmatprep.subr.mxu0 0.0
    %640 = vmatpush2.msra.mxu0 %v530
    %641 = vmatprep.subr.mxu0 0.0
    %642 = vmatpush2.msra.mxu0 %v529
    %643 = vmatprep.subr.mxu0 0.0
    %644 = vmatpush2.msra.mxu0 %v528
    %645 = vmatprep.subr.mxu0 0.0
    %646 = vmatpush2.msra.mxu0 %v527
    %647 = vmatprep.subr.mxu0 0.0
    %648 = vmatpush2.msra.mxu0 %v526
    %649 = vmatprep.subr.mxu0 0.0
    %650 = vmatpush2.msra.mxu0 %v525
    %651 = vmatprep.subr.mxu0 0.0
    %652 = vmatpush2.msra.mxu0 %v524
    %653 = vmatprep.subr.mxu0 0.0
    %654 = vmatpush2.msra.mxu0 %v523
    %655 = vmatprep.subr.mxu0 0.0
    %656 = vmatpush2.msra.mxu0 %v522
    %657 = vmatprep.subr.mxu0 0.0
    %658 = vmatpush2.msra.mxu0 %v521
    %659 = vmatprep.subr.mxu0 0.0
    %660 = vmatpush2.msra.mxu0 %v520
    %661 = vmatprep.subr.mxu0 0.0
    %662 = vmatpush2.msra.mxu0 %v519
    %663 = vmatprep.subr.mxu0 0.0
    %664 = vmatpush2.msra.mxu0 %v518
    %665 = vmatprep.subr.mxu0 0.0
    %666 = vmatpush2.msra.mxu0 %v517
    %667 = vmatprep.mubr.f32.mxu0 %v468
    %668 = vmatmul.mubr.f32.gmra.mxu0 %v467
    %v669 = vpop.f32.mrf.mxu0
    %v670 = vadd.f32 %v600, %v669
    %v671 = vpop.f32.mrf.mxu0
    %672 = vdwg.mxu0
    %v673 = vrot.slane %v670, 4
    %v674 = vadd.f32 %v670, %v673
    %v675 = vrot.slane %v674, 2
    %v676 = vadd.f32 %v674, %v675
    %v677 = vrot.slane %v676, 1
    %v678 = vadd.f32 %v676, %v677
    %v679 = vmul.f32 %v670, %v670
    %v680 = vrot.slane %v679, 4
    %v681 = vadd.f32 %v679, %v680
    %v682 = vrot.slane %v681, 2
    %v683 = vadd.f32 %v681, %v682
    %v684 = vrot.slane %v683, 1
    %v685 = vadd.f32 %v683, %v684
    %v686 = vmul.f32 %v678, 0.125
    %v687 = vmul.f32 %v685, 0.125
    %v688 = vmul.f32 %v686, %v686
    %v689 = vsub.f32 %v687, %v688
    %v690 = vmax.f32 %v689, 0.0
    %v691 = vadd.f32 %v690, 1e-05
    %v692 = vrsqrt.pop %v691
    %v693 = vld [vmem:[%s4] sm:$0x1]
    %v694 = vld [vmem:[%s4 + $0x1] sm:$0x1]
    %v695 = vmul.f32 %v693, %v692
    %v696 = vmul.f32 %v686, %v695
    %v697 = vsub.f32 %v694, %v696
    %v698 = vlaneseq
    %v699 = vshrl.u32 %v698, 7
    %v700 = vsub.s32 0, %v699
    %v701 = vrot.slane %v695, %v700
    %v702 = vmul.f32 %v670, %v701
    %v703 = vlaneseq
    %v704 = vshrl.u32 %v703, 7
    %v705 = vsub.s32 0, %v704
    %v706 = vrot.slane %v697, %v705
    %v707 = vadd.f32 %v702, %v706
    %v708 = vmax.f32 %v707, 0.0
    %v709 = vld [vmem:[%s5] sm:$0xff]
    %v710 = vld [vmem:[%s5 + $0x8] sm:$0xff]
    %v711 = vld [vmem:[%s5 + $0x10] sm:$0xff]
    %v712 = vld [vmem:[%s5 + $0x18] sm:$0xff]
    %v713 = vld [vmem:[%s5 + $0x20] sm:$0xff]
    %v714 = vld [vmem:[%s5 + $0x28] sm:$0xff]
    %v715 = vld [vmem:[%s5 + $0x30] sm:$0xff]
    %v716 = vld [vmem:[%s5 + $0x38] sm:$0xff]
    %v717 = vld [vmem:[%s5 + $0x40] sm:$0xff]
    %v718 = vld [vmem:[%s5 + $0x48] sm:$0xff]
    %v719 = vld [vmem:[%s5 + $0x50] sm:$0xff]
    %v720 = vld [vmem:[%s5 + $0x58] sm:$0xff]
    %v721 = vld [vmem:[%s5 + $0x60] sm:$0xff]
    %v722 = vld [vmem:[%s5 + $0x68] sm:$0xff]
    %v723 = vld [vmem:[%s5 + $0x70] sm:$0xff]
    %v724 = vld [vmem:[%s5 + $0x78] sm:$0xff]
    %725 = vmatprep.subr.mxu0 0.0
    %726 = vmatpush1.msra.mxu0 %v724
    %727 = vmatprep.subr.mxu0 0.0
    %728 = vmatpush1.msra.mxu0 %v723
    %729 = vmatprep.subr.mxu0 0.0
    %730 = vmatpush1.msra.mxu0 %v722
    %731 = vmatprep.subr.mxu0 0.0
    %732 = vmatpush1.msra.mxu0 %v721
    %733 = vmatprep.subr.mxu0 0.0
    %734 = vmatpush1.msra.mxu0 %v720
    %735 = vmatprep.subr.mxu0 0.0
    %736 = vmatpush1.msra.mxu0 %v719
    %737 = vmatprep.subr.mxu0 0.0
    %738 = vmatpush1.msra.mxu0 %v718
    %739 = vmatprep.subr.mxu0 0.0
    %740 = vmatpush1.msra.mxu0 %v717
    %741 = vmatprep.subr.mxu0 0.0
    %742 = vmatpush1.msra.mxu0 %v716
    %743 = vmatprep.subr.mxu0 0.0
    %744 = vmatpush1.msra.mxu0 %v715
    %745 = vmatprep.subr.mxu0 0.0
    %746 = vmatpush1.msra.mxu0 %v714
    %747 = vmatprep.subr.mxu0 0.0
    %748 = vmatpush1.msra.mxu0 %v713
    %749 = vmatprep.subr.mxu0 0.0
    %750 = vmatpush1.msra.mxu0 %v712
    %751 = vmatprep.subr.mxu0 0.0
    %752 = vmatpush1.msra.mxu0 %v711
    %753 = vmatprep.subr.mxu0 0.0
    %754 = vmatpush1.msra.mxu0 %v710
    %755 = vmatprep.subr.mxu0 0.0
    %756 = vmatpush1.msra.mxu0 %v709
    %757 = vmatprep.subr.mxu0 0.0
    %758 = vmatpush2.msra.mxu0 0.0
    %759 = vmatprep.subr.mxu0 0.0
    %760 = vmatpush2.msra.mxu0 0.0
    %761 = vmatprep.subr.mxu0 0.0
    %762 = vmatpush2.msra.mxu0 0.0
    %763 = vmatprep.subr.mxu0 0.0
    %764 = vmatpush2.msra.mxu0 0.0
    %765 = vmatprep.subr.mxu0 0.0
    %766 = vmatpush2.msra.mxu0 0.0
    %767 = vmatprep.subr.mxu0 0.0
    %768 = vmatpush2.msra.mxu0 0.0
    %769 = vmatprep.subr.mxu0 0.0
    %770 = vmatpush2.msra.mxu0 0.0
    %771 = vmatprep.subr.mxu0 0.0
    %772 = vmatpush2.msra.mxu0 0.0
    %773 = vmatprep.subr.mxu0 0.0
    %774 = vmatpush2.msra.mxu0 0.0
    %775 = vmatprep.subr.mxu0 0.0
    %776 = vmatpush2.msra.mxu0 0.0
    %777 = vmatprep.subr.mxu0 0.0
    %778 = vmatpush2.msra.mxu0 0.0
    %779 = vmatprep.subr.mxu0 0.0
    %780 = vmatpush2.msra.mxu0 0.0
    %781 = vmatprep.subr.mxu0 0.0
    %782 = vmatpush2.msra.mxu0 0.0
    %783 = vmatprep.subr.mxu0 0.0
    %784 = vmatpush2.msra.mxu0 0.0
    %785 = vmatprep.subr.mxu0 0.0
    %786 = vmatpush2.msra.mxu0 0.0
    %787 = vmatprep.subr.mxu0 0.0
    %788 = vmatpush2.msra.mxu0 0.0
    %789 = vmatprep.mubr.f32.mxu0 0.0
    %790 = vmatmul.mubr.f32.gmra.mxu0 %v708
    %v791 = vpop.f32.mrf.mxu0
    %v792 = vadd.f32 0.0, %v791
    %v793 = vpop.f32.mrf.mxu0
    %794 = vdwg.mxu0
    %vm795 = vcmask 261120
    %v796 = vsel %vm795, %v792, 0.0
    %v797 = vrot.slane %v796, 4
    %v798 = vadd.f32 %v796, %v797
    %v799 = vrot.slane %v798, 2
    %v800 = vadd.f32 %v798, %v799
    %v801 = vrot.slane %v800, 1
    %v802 = vadd.f32 %v800, %v801
    %v803 = vmul.f32 %v792, %v792
    %v804 = vsel %vm795, %v803, 0.0
    %v805 = vrot.slane %v804, 4
    %v806 = vadd.f32 %v804, %v805
    %v807 = vrot.slane %v806, 2
    %v808 = vadd.f32 %v806, %v807
    %v809 = vrot.slane %v808, 1
    %v810 = vadd.f32 %v808, %v809
    %v811 = vmul.f32 %v802, 0.125
    %v812 = vmul.f32 %v810, 0.125
    %v813 = vmul.f32 %v811, %v811
    %v814 = vsub.f32 %v812, %v813
    %v815 = vmax.f32 %v814, 0.0
    %v816 = vadd.f32 %v815, 1e-05
    %v817 = vrsqrt.pop %v816
    %v818 = vld [vmem:[%s6] sm:$0x1]
    %v819 = vld [vmem:[%s6 + $0x1] sm:$0x1]
    %v820 = vmul.f32 %v818, %v817
    %v821 = vmul.f32 %v811, %v820
    %v822 = vsub.f32 %v819, %v821
    %v823 = vlaneseq
    %v824 = vshrl.u32 %v823, 7
    %v825 = vsub.s32 0, %v824
    %v826 = vrot.slane %v820, %v825
    %v827 = vmul.f32 %v792, %v826
    %v828 = vlaneseq
    %v829 = vshrl.u32 %v828, 7
    %v830 = vsub.s32 0, %v829
    %v831 = vrot.slane %v822, %v830
    %v832 = vadd.f32 %v827, %v831
    %v833 = vmax.f32 %v832, 0.0
    %v834 = vld [vmem:[%s7] sm:$0xff]
    %v835 = vld [vmem:[%s7 + $0x8] sm:$0xff]
    %v836 = vld [vmem:[%s7 + $0x10] sm:$0xff]
    %v837 = vld [vmem:[%s7 + $0x18] sm:$0xff]
    %v838 = vld [vmem:[%s8] sm:$0x1]
    %v840 = vlaneseq
    %v841 = vshrl.u32 %v840, 7
    %v842 = vsub.s32 0, %v841
    %v843 = vrot.slane %v838, %v842
    %v846 = vsel %vm795, %v833, 0
    %848 = vmatprep.subr.mxu0 0.0
    %849 = vmatpush1.msra.mxu0 0.0
    %850 = vmatprep.subr.mxu0 0.0
    %851 = vmatpush1.msra.mxu0 0.0
    %852 = vmatprep.subr.mxu0 0.0
    %853 = vmatpush1.msra.mxu0 0.0
    %854 = vmatprep.subr.mxu0 0.0
    %855 = vmatpush1.msra.mxu0 0.0
    %856 = vmatprep.subr.mxu0 0.0
    %857 = vmatpush1.msra.mxu0 0.0
    %858 = vmatprep.subr.mxu0 0.0
    %859 = vmatpush1.msra.mxu0 0.0
    %860 = vmatprep.subr.mxu0 0.0
    %861 = vmatpush1.msra.mxu0 0.0
    %862 = vmatprep.subr.mxu0 0.0
    %863 = vmatpush1.msra.mxu0 0.0
    %864 = vmatprep.subr.mxu0 0.0
    %865 = vmatpush1.msra.mxu0 0.0
    %866 = vmatprep.subr.mxu0 0.0
    %867 = vmatpush1.msra.mxu0 0.0
    %868 = vmatprep.subr.mxu0 0.0
    %869 = vmatpush1.msra.mxu0 0.0
    %870 = vmatprep.subr.mxu0 0.0
    %871 = vmatpush1.msra.mxu0 0.0
    %872 = vmatprep.subr.mxu0 0.0
    %873 = vmatpush1.msra.mxu0 %v837
    %874 = vmatprep.subr.mxu0 0.0
    %875 = vmatpush1.msra.mxu0 %v836
    %876 = vmatprep.subr.mxu0 0.0
    %877 = vmatpush1.msra.mxu0 %v835
    %878 = vmatprep.subr.mxu0 0.0
    %879 = vmatpush1.msra.mxu0 %v834
    %880 = vmatprep.subr.mxu0 0.0
    %881 = vmatpush2.msra.mxu0 0.0
    %882 = vmatprep.subr.mxu0 0.0
    %883 = vmatpush2.msra.mxu0 0.0
    %884 = vmatprep.subr.mxu0 0.0
    %885 = vmatpush2.msra.mxu0 0.0
    %886 = vmatprep.subr.mxu0 0.0
    %887 = vmatpush2.msra.mxu0 0.0
    %888 = vmatprep.subr.mxu0 0.0
    %889 = vmatpush2.msra.mxu0 0.0
    %890 = vmatprep.subr.mxu0 0.0
    %891 = vmatpush2.msra.mxu0 0.0
    %892 = vmatprep.subr.mxu0 0.0
    %893 = vmatpush2.msra.mxu0 0.0
    %894 = vmatprep.subr.mxu0 0.0
    %895 = vmatpush2.msra.mxu0 0.0
    %896 = vmatprep.subr.mxu0 0.0
    %897 = vmatpush2.msra.mxu0 0.0
    %898 = vmatprep.subr.mxu0 0.0
    %899 = vmatpush2.msra.mxu0 0.0
    %900 = vmatprep.subr.mxu0 0.0
    %901 = vmatpush2.msra.mxu0 0.0
    %902 = vmatprep.subr.mxu0 0.0
    %903 = vmatpush2.msra.mxu0 0.0
    %904 = vmatprep.subr.mxu0 0.0
    %905 = vmatpush2.msra.mxu0 0.0
    %906 = vmatprep.subr.mxu0 0.0
    %907 = vmatpush2.msra.mxu0 0.0
    %908 = vmatprep.subr.mxu0 0.0
    %909 = vmatpush2.msra.mxu0 0.0
    %910 = vmatprep.subr.mxu0 0.0
    %911 = vmatpush2.msra.mxu0 0.0
    %912 = vmatprep.mubr.f32.mxu0 0.0
    %913 = vmatmul.mubr.f32.gmra.mxu0 %v846
    %v914 = vpop.f32.mrf.mxu0
    %v915 = vadd.f32 %v843, %v914
    %v916 = vpop.f32.mrf.mxu0
    %917 = vdwg.mxu0
    %918 = vst [vmem:[#allocation7] sm:$0xff] %v915
    // Predicated region
    $region46: #{tpu_custom_call.1} parent=1 // pred_check
      _
    $region47: #{tpu_custom_call.1} parent=1 // pred_check_branch
      %920 = sbr.rel (0) target = $region49
    $region48: #{tpu_custom_call.1} parent=1 // pred_region
      %s922 = ssub.s32 128, 128
      %923 = vsyncadd [#allocation4], %s922
      %s925 = sshll.u32 [#allocation7], 4
      %s926 = int_to_ptr.vmem [resolvable:$true] %s925
      %928 = dma.vmem_to_hbm [thread:$0]  %s926, 128, %s9, [#allocation4]
    $region49: #{tpu_custom_call.1} parent=1 // pred_fallthru
      _
    // Predicated region
    $region50: #{tpu_custom_call.1} parent=1 // pred_check
      _
    $region51: #{tpu_custom_call.1} parent=1 // pred_check_branch
      %930 = sbr.rel (0) target = $region53
    $region52: #{tpu_custom_call.1} parent=1 // pred_region
      %931 = dma.done [#allocation4], 128
    $region53: #{tpu_custom_call.1} parent=1 // pred_fallthru
      _
    %932 = vsyncpa [#allocation3], 1
    %933 = vsyncpa [#allocation6], 1
    %934 = vsyncpa [#allocation4], 1

</llo_original>
